<compile_context>
chip_gen: v7x
topology: tpu7x:2x2x1
jax: 0.10.0
libtpu: 0.0.40
codegen_flags: <defaults>
</compile_context>

<pallas_src>
import jax
import jax.numpy as jnp
from jax.experimental import pallas as pl
from jax.experimental.pallas import tpu as pltpu

# ---- static loss configuration (DistanceLoss default kwargs) ----------------
ALPHA = 1.0
BETA = 1.0
POS_WEIGHT = 1.0
USE_OPPOSITE_SIGN = True
DIRECTIONAL_WEIGHT = 1.0
LOSS_TYPE = 1
# TODO(synk): am_constant > 0.1 branch (adaptive-margin filtering) needs a
# prior global mean over negative-pixel losses (two-pass); default am_constant
# is 0 so it is not implemented here.

_LANES = 128
_SUBLANES = 8


def _signed_focal_kernel(p_ref, g_ref, out_ref):
    i = pl.program_id(1)

    @pl.when(i == 0)
    def _init():
        out_ref[...] = jnp.zeros_like(out_ref)

    p_raw = p_ref[...].astype(jnp.float32)
    g = g_ref[...].astype(jnp.float32)
    p = jnp.tanh(p_raw)                       # DistanceLoss applies tanh (EUP)

    d = jnp.abs(p - g)                        # L1Loss(reduction='none')

    # unsigned weight = |p - g| ** beta * alpha  (beta=1 / alpha=1 folded away)
    uw = d
    if BETA != 1.0:
        uw = d ** BETA
    if ALPHA != 1.0:
        uw = uw * ALPHA

    # sign(p)*sign(g) > 0  ==  p_raw*g > 0  (tanh preserves sign; zeros match)
    same_sign = (p_raw * g) > 0.0
    if USE_OPPOSITE_SIGN:
        sw = jnp.maximum(uw, 1.0)             # clamp(min=1.0)
    else:
        sw = jnp.ones_like(g)
    w = jnp.where(same_sign, uw, sw)
    if POS_WEIGHT > 1.0:
        w = w * jnp.where(g > 0.0, jnp.float32(POS_WEIGHT), jnp.float32(1.0))
    if DIRECTIONAL_WEIGHT < 1.0:
        good_dir = same_sign & (jnp.abs(p) > jnp.abs(g))
        w = w * jnp.where(good_dir, jnp.float32(DIRECTIONAL_WEIGHT),
                          jnp.float32(1.0))
    if LOSS_TYPE == 3:
        w = w / jnp.maximum(jnp.abs(p), jnp.abs(g))
    # loss_type != 2 -> weight.detach(): forward-only, value unchanged.

    contrib = d * w                                           # (tile_rows, 128)
    # VPU-only partial reduction: sum the stack of (8,128) vregs into one vreg,
    # accumulate into the resident (1,8,128) output block (no XLU per step).
    partial = jnp.sum(contrib.reshape(-1, _SUBLANES, _LANES), axis=0)
    out_ref[...] += partial[None, :, :]


def distance_signed_focal_loss(pred, gt, *, tile_rows=4096, num_partials=2):
    """pred, gt: (B, C, D, H, W) float arrays -> loss of shape (1,) float32.

    bf16 (or any float) inputs are supported; the kernel upcasts to f32.
    """
    assert pred.shape == gt.shape
    total = pred.size
    inv_total = 1.0 / total

    rows = pl.cdiv(total, _LANES)
    rows_per_p = pl.cdiv(rows, num_partials)
    # Auto-shrink the tile for small inputs; keep it a multiple of 8 sublanes.
    tr = min(tile_rows, rows_per_p)
    tr = max(_SUBLANES, ((tr + _SUBLANES - 1) // _SUBLANES) * _SUBLANES)
    blocks_per_p = pl.cdiv(rows_per_p, tr)
    rows_padded = num_partials * blocks_per_p * tr
    pad = rows_padded * _LANES - total

    def to2d(x):
        flat = x.reshape(-1)
        if pad:
            # zero padding contributes exactly 0 loss (|0-0| * w == 0);
            # skipped entirely when the flat size already tiles evenly.
            flat = jnp.pad(flat, (0, pad))
        return flat.reshape(rows_padded, _LANES)

    p2 = to2d(pred)
    g2 = to2d(gt)

    in_map = lambda p, i: (p * blocks_per_p + i, 0)
    padded_total = rows_padded * _LANES
    cost = pl.CostEstimate(
        flops=8 * padded_total,
        transcendentals=padded_total,
        bytes_accessed=p2.size * p2.dtype.itemsize
        + g2.size * g2.dtype.itemsize
        + num_partials * _SUBLANES * _LANES * 4,
    )

    partials = pl.pallas_call(
        _signed_focal_kernel,
        out_shape=jax.ShapeDtypeStruct((num_partials, _SUBLANES, _LANES),
                                       jnp.float32),
        grid=(num_partials, blocks_per_p),
        in_specs=[
            pl.BlockSpec((tr, _LANES), in_map),
            pl.BlockSpec((tr, _LANES), in_map),
        ],
        out_specs=pl.BlockSpec((1, _SUBLANES, _LANES), lambda p, i: (p, 0, 0)),
        compiler_params=pltpu.CompilerParams(
            dimension_semantics=("parallel", "arbitrary")),
        cost_estimate=cost,
    )(p2, g2)

    # Final cross-lane/partial reduction + mean scale done once, outside.
    loss = jnp.sum(partials, dtype=jnp.float32) * inv_total
    return loss.reshape(1)  # matches torch output shape [1]


def _reference_loss(pred, gt):
    """Pure-JAX replica of the torch forward (for validation)."""
    p = jnp.tanh(pred.astype(jnp.float32))
    g = gt.astype(jnp.float32)
    C = g.shape[1]
    total = 0.0
    for c in range(C):
        pc = p[:, c:c + 1]
        gc = g[:, c:c + 1]
        l = jnp.abs(pc - gc)
        uw = (jnp.abs(pc - gc) ** BETA) * ALPHA
        sw = jnp.maximum(uw, 1.0)
        w = jnp.where(jnp.sign(pc) * jnp.sign(gc) > 0, uw, sw)
        total = total + jnp.mean(l * w, axis=(0, 2, 3, 4))
    return total / C


if __name__ == "__main__":
    key = jax.random.PRNGKey(0)
    kp, kg = jax.random.split(key)
    B, C, D, H, W = 2, 4, 4, 8, 16  # 4096 elements -> (32, 128) flat view
    pred = jax.random.normal(kp, (B, C, D, H, W), dtype=jnp.float32)
    gt = jax.random.uniform(kg, (B, C, D, H, W), dtype=jnp.float32,
                            minval=-1.0, maxval=1.0)

    out = distance_signed_focal_loss(pred, gt)
    jax.block_until_ready(out)

    ref = _reference_loss(pred, gt)
    assert out.shape == (1,)
    assert jnp.allclose(out, ref, atol=1e-5, rtol=1e-5), (out, ref)
    print("KERNEL_OK")
</pallas_src>

<mosaic_0001>
module attributes {stable_mosaic.version = 11 : i64} {
  func.func @_signed_focal_kernel(%arg0: i32, %arg1: i32, %arg2: memref<16x128xf32, #tpu.memory_space<vmem>>, %arg3: memref<16x128xf32, #tpu.memory_space<vmem>>, %arg4: memref<1x8x128xf32, #tpu.memory_space<vmem>>) attributes {dimension_semantics = [#tpu.dimension_semantics<parallel>, #tpu.dimension_semantics<arbitrary>], iteration_bounds = array<i64: 2, 1>, scalar_prefetch = 0 : i64, scratch_operands = 0 : i64, tpu.core_type = #tpu.core_type<tc>, window_params = [{transform_indices = @transform_0, window_bounds = array<i64: 16, 128>}, {transform_indices = @transform_1, window_bounds = array<i64: 16, 128>}, {transform_indices = @transform_2, window_bounds = array<i64: 1, 8, 128>}]} {
    %c0_i32 = arith.constant 0 : i32
    %0 = arith.cmpi eq, %arg1, %c0_i32 : i32
    %1 = arith.extui %0 : i1 to i32
    %c0_i32_0 = arith.constant 0 : i32
    %2 = arith.cmpi ne, %1, %c0_i32_0 : i32
    scf.if %2 {
      %cst_12 = arith.constant 0.000000e+00 : f32
      %21 = vector.broadcast %cst_12 : f32 to vector<1x8x128xf32>
      %c0_13 = arith.constant 0 : index
      %c0_14 = arith.constant 0 : index
      %c0_15 = arith.constant 0 : index
      %22 = vector.load %arg4[%c0_13, %c0_14, %c0_15] : memref<1x8x128xf32, #tpu.memory_space<vmem>>, vector<1x8x128xf32>
      tpu.vector_store %arg4[%c0_13, %c0_14, %c0_15], %21 {strides = array<i32>} : memref<1x8x128xf32, #tpu.memory_space<vmem>>, vector<1x8x128xf32>,
    } else {
    }
    %c0 = arith.constant 0 : index
    %c0_1 = arith.constant 0 : index
    %3 = vector.load %arg2[%c0, %c0_1] : memref<16x128xf32, #tpu.memory_space<vmem>>, vector<16x128xf32>
    %c0_2 = arith.constant 0 : index
    %c0_3 = arith.constant 0 : index
    %4 = vector.load %arg3[%c0_2, %c0_3] : memref<16x128xf32, #tpu.memory_space<vmem>>, vector<16x128xf32>
    %5 = math.tanh %3 : vector<16x128xf32>
    %6 = arith.subf %5, %4 : vector<16x128xf32>
    %7 = math.absf %6 : vector<16x128xf32>
    %8 = arith.mulf %3, %4 : vector<16x128xf32>
    %cst = arith.constant 0.000000e+00 : f32
    %9 = vector.broadcast %cst : f32 to vector<16x128xf32>
    %10 = arith.cmpf ogt, %8, %9 : vector<16x128xf32>
    %cst_4 = arith.constant 1.000000e+00 : f32
    %11 = vector.broadcast %cst_4 : f32 to vector<16x128xf32>
    %12 = arith.maximumf %7, %11 : vector<16x128xf32>
    %13 = arith.select %10, %7, %12 : vector<16x128xi1>, vector<16x128xf32>
    %14 = arith.mulf %7, %13 : vector<16x128xf32>
    %15 = vector.shape_cast %14 : vector<16x128xf32> to vector<2x8x128xf32>
    %cst_5 = arith.constant dense<0.000000e+00> : vector<8x128xf32>
    %16 = vector.multi_reduction <add>, %15, %cst_5 [0] : vector<2x8x128xf32> to vector<8x128xf32>
    %c0_6 = arith.constant 0 : index
    %c0_7 = arith.constant 0 : index
    %c0_8 = arith.constant 0 : index
    %17 = vector.load %arg4[%c0_6, %c0_7, %c0_8] : memref<1x8x128xf32, #tpu.memory_space<vmem>>, vector<1x8x128xf32>
    %18 = vector.shape_cast %16 : vector<8x128xf32> to vector<1x8x128xf32>
    %19 = arith.addf %17, %18 : vector<1x8x128xf32>
    %c0_9 = arith.constant 0 : index
    %c0_10 = arith.constant 0 : index
    %c0_11 = arith.constant 0 : index
    %20 = vector.load %arg4[%c0_9, %c0_10, %c0_11] : memref<1x8x128xf32, #tpu.memory_space<vmem>>, vector<1x8x128xf32>
    tpu.vector_store %arg4[%c0_9, %c0_10, %c0_11], %19 {strides = array<i32>} : memref<1x8x128xf32, #tpu.memory_space<vmem>>, vector<1x8x128xf32>,
    return
  }
  func.func @transform_0(%arg0: i32, %arg1: i32) -> (i32, i32) {
    %c1_i32 = arith.constant 1 : i32
    %0 = arith.muli %arg0, %c1_i32 : i32
    %1 = arith.addi %0, %arg1 : i32
    %c0_i32 = arith.constant 0 : i32
    %c0_i32_0 = arith.constant 0 : i32
    return %1, %c0_i32 : i32, i32
  }
  func.func @transform_1(%arg0: i32, %arg1: i32) -> (i32, i32) {
    %c1_i32 = arith.constant 1 : i32
    %0 = arith.muli %arg0, %c1_i32 : i32
    %1 = arith.addi %0, %arg1 : i32
    %c0_i32 = arith.constant 0 : i32
    %c0_i32_0 = arith.constant 0 : i32
    return %1, %c0_i32 : i32, i32
  }
  func.func @transform_2(%arg0: i32, %arg1: i32) -> (i32, i32, i32) {
    %c0_i32 = arith.constant 0 : i32
    %c0_i32_0 = arith.constant 0 : i32
    %c0_i32_1 = arith.constant 0 : i32
    return %arg0, %c0_i32, %c0_i32_0 : i32, i32, i32
  }
}

</mosaic_0001>

<llo_original>
// kernel: tpu_custom_call.1
$region0: #{tpu_custom_call.1}
  #allocation0 [shape = 'u32[]', space=smem, size = 0x4, offset = 0x4, fixed_abs, tag = 'smem constant byte address 0x4 - core index']
  #allocation1 [shape = 'u32[144,128]{1,0:T(1,128)}', space=vmem, size = 0x12000, scoped, tag = 'internal scratch']
  %s0 = inlined_call_operand.hbm [shape: f32[32,128], index: 0, kind: input, shape index: {}]
  %s1 = inlined_call_operand.hbm [shape: f32[32,128], index: 1, kind: input, shape index: {}]
  %s2 = inlined_call_operand.hbm [shape: f32[2,8,128], index: 2, kind: output, shape index: {}]
  %s3 = sld [smem:[#allocation0]]
  $region53: #{tpu_custom_call.1} parent=0
    _
  %s5 = ssub.s32 1, %s3
  %s6 = scalar_select 0, %s5, %s3
  $region1: #{tpu_custom_call.1} parent=0
    #allocation2 [shape = 'u8[16384]{0}', space=vmem, size = 0x4000, scoped, tag = 'input window, operand 0']
    #allocation3 [shape = 's32[2]{0}', space=sflag, size = 0x8, scoped, tag = 'scoped memory for tpu_custom_call.1']
    #allocation4 [shape = 's32[2]{0}', space=sflag, size = 0x8, scoped, tag = 'scoped memory for tpu_custom_call.1']
    #allocation5 [shape = 'u8[16384]{0}', space=vmem, size = 0x4000, scoped, tag = 'input window, operand 1']
    #allocation6 [shape = 's32[2]{0}', space=sflag, size = 0x8, scoped, tag = 'scoped memory for tpu_custom_call.1']
    #allocation7 [shape = 'u8[8192]{0}', space=vmem, size = 0x2000, scoped, tag = 'output window, operand 0']
    %7 = vsyncpa [#allocation3], 0
    %s8 = scalar_lea.sflag [#allocation3], 1
    %9 = vsyncpa %s8, 0
    %10 = vsyncpa [#allocation6], 0
    %s11 = scalar_lea.sflag [#allocation6], 1
    %12 = vsyncpa %s11, 0
    %13 = vsyncpa [#allocation4], 0
    %s14 = scalar_lea.sflag [#allocation4], 1
    %15 = vsyncpa %s14, 0
    loop: start=0, step=1, limit=4
    $region2: #{tpu_custom_call.1} parent=1 // loop_pre_header
      _
    $region3: #{tpu_custom_call.1} parent=1 // loop_header
      %s17 = sphi 0, %s21
      %p18 = scmp.ge.s32.totalorder %s17, 4
      %s24 = sphi 0, %s36
      %s25 = sphi 0, %s32
      %s26 = sphi 0, %s24
      %s27 = sphi 0, %s25
      %s28 = sphi 0, %s26
      %s29 = sphi 0, %s27
      %s41 = sphi 0, %s43
      %s44 = sphi 0, %s41
      %s45 = sphi 0, %s44
      %s61 = sphi 0, %s45
      %s69 = sphi 0, %s71
      %s72 = sphi 0, %s69
      %s73 = sphi 0, %s72
      %s89 = sphi 0, %s73
      %s95 = sphi 0, %s97
      %s98 = sphi 0, %s95
      %s99 = sphi 0, %s98
      %s115 = sphi 0, %s99
    $region4: #{tpu_custom_call.1} parent=1 // loop_header_branch
      %20 = sbr.rel (%p18) target = $region8
    $region5: #{tpu_custom_call.1} parent=1 // loop_body
      %s22 = ssub.s32 %s17, 1
      %s23 = ssub.s32 %s17, 2
      %s30 = sadd.s32 1, %s25
      %p31 = scmp.ge.s32.totalorder %s30, 1
      %s32 = scalar_select %p31, 0, %s30
      %s33 = sadd.s32 1, %s24
      %s34 = scalar_select %p31, %s33, %s24
      %p35 = scmp.ge.s32.totalorder %s34, 2
      %s36 = scalar_select %p35, 0, %s34
      %s37 = sadd.s32 %s24, %s25
      %s38 = sadd.s32 %s36, %s32
      %s39 = ssub.s32 %s37, %s38
      %p40 = scmp.eq.s32.totalorder %s39, 0
      %s42 = sadd.s32 %s41, 1
      %s43 = scalar_select %p40, %s41, %s42
      %p46 = pneg %p40
      %p47 = scmp.eq.s32.totalorder %s17, 1
      %p48 = por %p46, %p47
      %p49 = scmp.ne.s32.totalorder %s41, %s44
      %p50 = scmp.eq.s32.totalorder %s17, 0
      %p51 = por %p49, %p50
      %p52 = scmp.ne.s32.totalorder %s41, %s44
      %p53 = scmp.eq.s32.totalorder %s22, 1
      %p54 = por %p52, %p53
      %p55 = scmp.ne.s32.totalorder %s44, %s45
      %p56 = scmp.eq.s32.totalorder %s22, 0
      %p57 = por %p55, %p56
      %p58 = scmp.ne.s32.totalorder %s44, %s45
      %p59 = scmp.eq.s32.totalorder %s23, 1
      %p60 = por %p58, %p59
      %p62 = scmp.ne.s32.totalorder %s45, %s61
      %p63 = scmp.eq.s32.totalorder %s23, 0
      %p64 = por %p62, %p63
      %s65 = sadd.s32 %s24, %s25
      %s66 = sadd.s32 %s36, %s32
      %s67 = ssub.s32 %s65, %s66
      %p68 = scmp.eq.s32.totalorder %s67, 0
      %s70 = sadd.s32 %s69, 1
      %s71 = scalar_select %p68, %s69, %s70
      %p74 = pneg %p68
      %p75 = scmp.eq.s32.totalorder %s17, 1
      %p76 = por %p74, %p75
      %p77 = scmp.ne.s32.totalorder %s69, %s72
      %p78 = scmp.eq.s32.totalorder %s17, 0
      %p79 = por %p77, %p78
      %p80 = scmp.ne.s32.totalorder %s69, %s72
      %p81 = scmp.eq.s32.totalorder %s22, 1
      %p82 = por %p80, %p81
      %p83 = scmp.ne.s32.totalorder %s72, %s73
      %p84 = scmp.eq.s32.totalorder %s22, 0
      %p85 = por %p83, %p84
      %p86 = scmp.ne.s32.totalorder %s72, %s73
      %p87 = scmp.eq.s32.totalorder %s23, 1
      %p88 = por %p86, %p87
      %p90 = scmp.ne.s32.totalorder %s73, %s89
      %p91 = scmp.eq.s32.totalorder %s23, 0
      %p92 = por %p90, %p91
      %s93 = ssub.s32 %s24, %s36
      %p94 = scmp.eq.s32.totalorder %s93, 0
      %s96 = sadd.s32 %s95, 1
      %s97 = scalar_select %p94, %s95, %s96
      %p100 = pneg %p94
      %p101 = scmp.eq.s32.totalorder %s17, 1
      %p102 = por %p100, %p101
      %p103 = scmp.ne.s32.totalorder %s95, %s98
      %p104 = scmp.eq.s32.totalorder %s17, 0
      %p105 = por %p103, %p104
      %p106 = scmp.ne.s32.totalorder %s95, %s98
      %p107 = scmp.eq.s32.totalorder %s22, 1
      %p108 = por %p106, %p107
      %p109 = scmp.ne.s32.totalorder %s98, %s99
      %p110 = scmp.eq.s32.totalorder %s22, 0
      %p111 = por %p109, %p110
      %p112 = scmp.ne.s32.totalorder %s98, %s99
      %p113 = scmp.eq.s32.totalorder %s23, 1
      %p114 = por %p112, %p113
      %p116 = scmp.ne.s32.totalorder %s99, %s115
      %p117 = scmp.eq.s32.totalorder %s23, 0
      %p118 = por %p116, %p117
      %p119 = scmp.le.s32.totalorder 1, %s17
      %p120 = scmp.lt.s32.totalorder %s17, 3
      %p121 = pnand %p119, %p120
      %p122 = pneg %p121
      // Predicated region
      $region9: #{tpu_custom_call.1} parent=5 // pred_check
        _
      $region10: #{tpu_custom_call.1} parent=5 // pred_check_branch
        %124 = sbr.rel (%p121) target = $region12
      $region11: #{tpu_custom_call.1} parent=5 // pred_region
        %s125 = ssub.s32 %s17, 1
      $region12: #{tpu_custom_call.1} parent=5 // pred_fallthru
        _
      %p126 = scmp.lt.s32.totalorder %s17, 2
      // Predicated region
      $region13: #{tpu_custom_call.1} parent=5 // pred_check
        %p127 = pneg %p126
      $region14: #{tpu_custom_call.1} parent=5 // pred_check_branch
        %129 = sbr.rel (%p127) target = $region16
      $region15: #{tpu_custom_call.1} parent=5 // pred_region
        // Predicated region
        $region17: #{tpu_custom_call.1} parent=15 // pred_check
          %p130 = pneg %p51
        $region18: #{tpu_custom_call.1} parent=15 // pred_check_branch
          %132 = sbr.rel (%p130) target = $region20
        $region19: #{tpu_custom_call.1} parent=15 // pred_region
          %s133 = sand.u32 %s41, 1
          %s134 = scalar_lea.sflag [#allocation3], %s133
          %s135 = sand.u32 %s41, 1
          %s136 = smul.addr %s135, 16
          %s137 = scalar_lea.vmem [#allocation2], %s136
          %s138 = sadd.s32 %s24, %s25
          %s139 = smul.u32 2, %s138
          %s141 = ssub.s32 256, 256
          %142 = vsyncadd %s134, %s141
          %s143 = smul.addr %s139, 128
          %s144 = scalar_lea.hbm %s0, %s143
          %s145 = sshll.u32 %s137, 4
          %s146 = int_to_ptr.vmem [resolvable:$true] %s145
          %151 = dma.hbm_to_vmem [thread:$0]  %s144, 256, %s146, %s134, 128, 128, 8
        $region20: #{tpu_custom_call.1} parent=15 // pred_fallthru
          _
        // Predicated region
        $region21: #{tpu_custom_call.1} parent=15 // pred_check
          %p152 = pneg %p79
        $region22: #{tpu_custom_call.1} parent=15 // pred_check_branch
          %154 = sbr.rel (%p152) target = $region24
        $region23: #{tpu_custom_call.1} parent=15 // pred_region
          %s155 = sand.u32 %s69, 1
          %s156 = scalar_lea.sflag [#allocation6], %s155
          %s157 = sand.u32 %s69, 1
          %s158 = smul.addr %s157, 16
          %s159 = scalar_lea.vmem [#allocation5], %s158
          %s160 = sadd.s32 %s24, %s25
          %s161 = smul.u32 2, %s160
          %s163 = ssub.s32 256, 256
          %164 = vsyncadd %s156, %s163
          %s165 = smul.addr %s161, 128
          %s166 = scalar_lea.hbm %s1, %s165
          %s167 = sshll.u32 %s159, 4
          %s168 = int_to_ptr.vmem [resolvable:$true] %s167
          %173 = dma.hbm_to_vmem [thread:$0]  %s166, 256, %s168, %s156, 128, 128, 8
        $region24: #{tpu_custom_call.1} parent=15 // pred_fallthru
          _
      $region16: #{tpu_custom_call.1} parent=5 // pred_fallthru
        _
      %p174 = scmp.le.s32.totalorder 1, %s17
      %p175 = scmp.lt.s32.totalorder %s17, 3
      %p176 = pnand %p174, %p175
      %p177 = pneg %p176
      // Predicated region
      $region25: #{tpu_custom_call.1} parent=5 // pred_check
        _
      $region26: #{tpu_custom_call.1} parent=5 // pred_check_branch
        %179 = sbr.rel (%p176) target = $region28
      $region27: #{tpu_custom_call.1} parent=5 // pred_region
        %s180 = ssub.s32 %s17, 1
        %s181 = sand.u32 %s44, 1
        %s182 = scalar_lea.sflag [#allocation3], %s181
        %s183 = sand.u32 %s44, 1
        %s184 = smul.addr %s183, 16
        %s185 = scalar_lea.vmem [#allocation2], %s184
        // Predicated region
        $region29: #{tpu_custom_call.1} parent=27 // pred_check
          %p186 = pneg %p57
        $region30: #{tpu_custom_call.1} parent=27 // pred_check_branch
          %188 = sbr.rel (%p186) target = $region32
        $region31: #{tpu_custom_call.1} parent=27 // pred_region
          %189 = dma.done %s182, 256
        $region32: #{tpu_custom_call.1} parent=27 // pred_fallthru
          _
        %s190 = sand.u32 %s72, 1
        %s191 = scalar_lea.sflag [#allocation6], %s190
        %s192 = sand.u32 %s72, 1
        %s193 = smul.addr %s192, 16
        %s194 = scalar_lea.vmem [#allocation5], %s193
        // Predicated region
        $region33: #{tpu_custom_call.1} parent=27 // pred_check
          %p195 = pneg %p85
        $region34: #{tpu_custom_call.1} parent=27 // pred_check_branch
          %197 = sbr.rel (%p195) target = $region36
        $region35: #{tpu_custom_call.1} parent=27 // pred_region
          %198 = dma.done %s191, 256
        $region36: #{tpu_custom_call.1} parent=27 // pred_fallthru
          _
        %s199 = sand.u32 %s44, 1
        %s200 = scalar_lea.sflag [#allocation3], %s199
        %s201 = sand.u32 %s44, 1
        %s202 = smul.addr %s201, 16
        %s203 = scalar_lea.vmem [#allocation2], %s202
        %p204 = pneg %p57
        %p205 = pneg %p54
        %s206 = sand.u32 %s72, 1
        %s207 = scalar_lea.sflag [#allocation6], %s206
        %s208 = sand.u32 %s72, 1
        %s209 = smul.addr %s208, 16
        %s210 = scalar_lea.vmem [#allocation5], %s209
        %p211 = pneg %p85
        %p212 = pneg %p82
        %p213 = pneg %p111
        %p214 = pneg %p108
        %s215 = sand.u32 %s98, 1
        %s216 = scalar_lea.sflag [#allocation4], %s215
        %s217 = sand.u32 %s98, 1
        %s218 = smul.addr %s217, 8
        %s219 = scalar_lea.vmem [#allocation7], %s218
        %s220 = sadd.s32 %s26, %s27
        %s221 = smul.u32 2, %s220
        %s222 = sadd.s32 %s26, %s27
        %s223 = smul.u32 2, %s222
        %p224 = scmp.eq.s32.totalorder %s27, 0
        // Predicated region
        $region37: #{tpu_custom_call.1} parent=27 // pred_check
          %p225 = pneg %p224
        $region38: #{tpu_custom_call.1} parent=27 // pred_check_branch
          %227 = sbr.rel (%p225) target = $region40
        $region39: #{tpu_custom_call.1} parent=27 // pred_region
          %228 = vst [vmem:[%s219] sm:$0xff] 0.0
        $region40: #{tpu_custom_call.1} parent=27 // pred_fallthru
          _
        %v229 = vld [vmem:[%s185] sm:$0xff]
        %v230 = vld [vmem:[%s185 + $0x8] sm:$0xff]
        %v231 = vld [vmem:[%s194] sm:$0xff]
        %v232 = vld [vmem:[%s194 + $0x8] sm:$0xff]
        %v233 = vtanh.pop %v229
        %v234 = vtanh.pop %v230
        %v235 = vsub.f32 %v233, %v231
        %v236 = vsub.f32 %v234, %v232
        %v237 = vand.u32 2147483647, %v235
        %v238 = vand.u32 2147483647, %v236
        %v239 = vmul.f32 %v229, %v231
        %v240 = vmul.f32 %v230, %v232
        %vm241 = vcmp.gt.f32.partialorder %v239, 0.0
        %vm242 = vcmp.gt.f32.partialorder %v240, 0.0
        %v243 = vmax.f32 %v237, 1.0
        %v244 = vmax.f32 %v238, 1.0
        %v245 = vsel %vm241, %v237, %v243
        %v246 = vsel %vm242, %v238, %v244
        %v247 = vmul.f32 %v237, %v245
        %v248 = vmul.f32 %v238, %v246
        %v249 = vadd.f32 %v247, %v248
        %v250 = vld [vmem:[%s219] sm:$0xff]
        %v251 = vadd.f32 %v250, %v249
        %252 = vst [vmem:[%s219] sm:$0xff] %v251
        %s253 = sand.u32 %s98, 1
        %s254 = scalar_lea.sflag [#allocation4], %s253
        %s255 = sand.u32 %s98, 1
        %s256 = smul.addr %s255, 8
        %s257 = scalar_lea.vmem [#allocation7], %s256
        // Predicated region
        $region41: #{tpu_custom_call.1} parent=27 // pred_check
          %p258 = pneg %p108
        $region42: #{tpu_custom_call.1} parent=27 // pred_check_branch
          %260 = sbr.rel (%p258) target = $region44
        $region43: #{tpu_custom_call.1} parent=27 // pred_region
          %s262 = ssub.s32 128, 128
          %263 = vsyncadd %s254, %s262
          %s264 = smul.addr %s26, 128
          %s265 = scalar_lea.hbm %s2, %s264
          %s267 = sshll.u32 %s257, 4
          %s268 = int_to_ptr.vmem [resolvable:$true] %s267
          %270 = dma.vmem_to_hbm [thread:$0]  %s268, 128, %s265, %s254
        $region44: #{tpu_custom_call.1} parent=27 // pred_fallthru
          _
      $region28: #{tpu_custom_call.1} parent=5 // pred_fallthru
        _
      %p271 = scmp.le.s32.totalorder 2, %s17
      // Predicated region
      $region45: #{tpu_custom_call.1} parent=5 // pred_check
        %p272 = pneg %p271
      $region46: #{tpu_custom_call.1} parent=5 // pred_check_branch
        %274 = sbr.rel (%p272) target = $region48
      $region47: #{tpu_custom_call.1} parent=5 // pred_region
        %s275 = ssub.s32 %s17, 2
        // Predicated region
        $region49: #{tpu_custom_call.1} parent=47 // pred_check
          %p276 = pneg %p114
        $region50: #{tpu_custom_call.1} parent=47 // pred_check_branch
          %278 = sbr.rel (%p276) target = $region52
        $region51: #{tpu_custom_call.1} parent=47 // pred_region
          %s279 = sand.u32 %s99, 1
          %s280 = scalar_lea.sflag [#allocation4], %s279
          %s281 = sand.u32 %s99, 1
          %s282 = smul.addr %s281, 8
          %s283 = scalar_lea.vmem [#allocation7], %s282
          %284 = dma.done %s280, 128
        $region52: #{tpu_custom_call.1} parent=47 // pred_fallthru
          _
      $region48: #{tpu_custom_call.1} parent=5 // pred_fallthru
        _
    $region6: #{tpu_custom_call.1} parent=1 // loop_footer
      %s21 = sadd.s32 1, %s17
    $region7: #{tpu_custom_call.1} parent=1 // loop_footer_branch
      %16 = sbr.rel target = $region3
    $region8: #{tpu_custom_call.1} parent=1 // loop_exit
      _
    %285 = vsyncpa [#allocation3], 1
    %s286 = scalar_lea.sflag [#allocation3], 1
    %287 = vsyncpa %s286, 1
    %288 = vsyncpa [#allocation6], 1
    %s289 = scalar_lea.sflag [#allocation6], 1
    %290 = vsyncpa %s289, 1
    %291 = vsyncpa [#allocation4], 1
    %s292 = scalar_lea.sflag [#allocation4], 1
    %293 = vsyncpa %s292, 1

</llo_original>
